<compile_context>
chip_gen: v6e
topology: v6e:2x2x1
jax: 0.10.0
libtpu: 0.0.40
codegen_flags: <defaults>
</compile_context>

<pallas_src>
import jax
import jax.numpy as jnp
from jax.experimental import pallas as pl
from jax.experimental.pallas import tpu as pltpu

LANE = 128          # vreg lane width: all feature dims padded to this
MAX_TILE_B = 512    # ~85% of HBM roofline measured at 512-row tiles


def _round_up(n: int, m: int) -> int:
    return ((n + m - 1) // m) * m


def _cdiv(n: int, m: int) -> int:
    return (n + m - 1) // m


def _sublane(dtype) -> int:
    """Packed sublane tile of the compute dtype: 8 f32, 16 bf16, 32 int8/fp8."""
    return max(8, 32 // jnp.dtype(dtype).itemsize)


def _vmem_budget_bytes() -> int:
    """Generation-aware usable-VMEM budget for this kernel's working set."""
    kind = ""
    try:
        kind = jax.devices()[0].device_kind.lower()
    except Exception:  # pragma: no cover - defensive
        pass
    if "v7" in kind:
        return 48 * 1024 * 1024      # 64 MiB physical on v7x -> leave headroom
    if "v4" in kind or "v5" in kind or "v6" in kind:
        return 96 * 1024 * 1024      # 128 MiB physical
    return 48 * 1024 * 1024          # unknown -> conservative (safe everywhere)


# ----------------------------- kernels ------------------------------------ #

def _mlp_kernel_resident(x_ref, w1_ref, b1_ref, w2_ref, b2_ref, o_ref):
    """Fused fc1 -> ReLU -> fc2 on one [tile_b, D_in_p] row tile.

    Weights / biases are VMEM-resident for the whole batch grid (constant
    index_map, single-buffered); the hidden activation never leaves VMEM/vregs.
    """
    h = jnp.dot(x_ref[...], w1_ref[...], preferred_element_type=jnp.float32)
    h = jnp.maximum(h + b1_ref[...], 0.0)            # bias + ReLU in f32 (VPU)
    if h.dtype != w2_ref.dtype:                      # real cast only on bf16 path
        h = h.astype(w2_ref.dtype)
    out = jnp.dot(h, w2_ref[...], preferred_element_type=jnp.float32)
    o_ref[...] = (out + b2_ref[...]).astype(o_ref.dtype)


def _mlp_kernel_htiled(x_ref, w1_ref, b1_ref, w2_ref, b2_ref, o_ref, acc_ref):
    """Same fusion with the hidden dim tiled on grid axis 1 (weights > VMEM)."""
    hi = pl.program_id(1)

    @pl.when(hi == 0)
    def _():
        acc_ref[...] = jnp.zeros_like(acc_ref)

    h = jnp.dot(x_ref[...], w1_ref[...], preferred_element_type=jnp.float32)
    h = jnp.maximum(h + b1_ref[...], 0.0)
    if h.dtype != w2_ref.dtype:
        h = h.astype(w2_ref.dtype)
    acc_ref[...] += jnp.dot(h, w2_ref[...], preferred_element_type=jnp.float32)

    @pl.when(hi == pl.num_programs(1) - 1)
    def _():
        o_ref[...] = (acc_ref[...] + b2_ref[...]).astype(o_ref.dtype)


# --------------------------- tile selection -------------------------------- #

def _choose_tiles(B, d_in_p, h_p, d_out_p, cd_size, out_size, budget, sublane):
    # Batch tile: at most MAX_TILE_B, never (much) larger than B, and capped so
    # the batch grid has >= 2 steps when B allows (lets v7x's 2nd TC help).
    if B < sublane:
        b_cands = [B]                       # block dim == full array dim: legal
    else:
        b_cap = min(MAX_TILE_B, _round_up(B, sublane))
        if B >= 2 * sublane:
            b_cap = min(b_cap, _round_up(_cdiv(B, 2), sublane))
        b_cands = list(range(b_cap, 0, -sublane))

    def fits(tb, th, w_bufs):
        x_b = 2 * tb * d_in_p * cd_size           # double-buffered x tile
        o_b = 2 * tb * d_out_p * out_size         # double-buffered out tile
        s_b = tb * d_out_p * 4 + tb * th * 4      # acc scratch + hidden interm.
        w_b = w_bufs * (d_in_p * th + th * d_out_p) * cd_size
        bias = w_bufs * th * 4 + d_out_p * 4
        return x_b + o_b + s_b + w_b + bias <= budget

    # 1) Fully VMEM-resident weights (single-buffered), tile only the batch.
    for tb in b_cands:
        if fits(tb, h_p, 1):
            return tb, h_p
    # 2) Weights too large: tile H.  tile_h must exactly divide H_p (and stay a
    #    multiple of 128) so no out-of-bounds garbage ever reaches the
    #    accumulator; these blocks change every step -> double-buffered.
    m = h_p // LANE
    h_divs = [LANE * d for d in range(m - 1, 0, -1) if m % d == 0]
    for tb in b_cands:
        for th in h_divs:
            if fits(tb, th, 2):
                return tb, th
    # Last resort: smallest tiles (may spill, but still compiles).
    return b_cands[-1], LANE


# ------------------------------ wrapper ------------------------------------ #

class CustomNNPallas:
    """fc1 -> ReLU -> fc2.  Weights are padded once; the forward is jitted."""

    def __init__(self, w1, b1, w2, b2, compute_dtype=None):
        # w1: [D_in, H], b1: [H], w2: [H, D_out], b2: [D_out]
        # (already transposed relative to PyTorch nn.Linear's [out, in] layout)
        self.d_in, self.h = w1.shape
        self.d_out = w2.shape[1]
        self.cd = jnp.dtype(compute_dtype) if compute_dtype is not None else jnp.dtype(w1.dtype)

        self.d_in_p = _round_up(self.d_in, LANE)
        self.h_p = _round_up(self.h, LANE)
        self.d_out_p = _round_up(self.d_out, LANE)

        # One-time lane-dense padding.  Zero padding is exact: padded x columns
        # hit zero W1 rows, padded H lanes go bias 0 -> ReLU 0 -> zero W2 rows,
        # padded D_out columns are sliced off after the kernel.
        self.w1p = jnp.pad(w1.astype(self.cd),
                           ((0, self.d_in_p - self.d_in), (0, self.h_p - self.h)))
        self.w2p = jnp.pad(w2.astype(self.cd),
                           ((0, self.h_p - self.h), (0, self.d_out_p - self.d_out)))
        self.b1p = jnp.pad(b1.astype(jnp.float32), (0, self.h_p - self.h)).reshape(1, self.h_p)
        self.b2p = jnp.pad(b2.astype(jnp.float32), (0, self.d_out_p - self.d_out)).reshape(1, self.d_out_p)

        self._fwd = jax.jit(self._forward)

    def __call__(self, x):
        return self._fwd(x, self.w1p, self.b1p, self.w2p, self.b2p)

    def _forward(self, x, w1p, b1p, w2p, b2p):
        B = x.shape[0]
        out_dtype = x.dtype
        cd = self.cd
        cd_size = jnp.dtype(cd).itemsize
        out_size = jnp.dtype(out_dtype).itemsize
        d_in_p, h_p, d_out_p = self.d_in_p, self.h_p, self.d_out_p

        # x: cast to the MXU operand dtype; pad only the K (D_in) remainder.
        # When D_in is already a multiple of 128 (and dtype matches) x is
        # passed straight through -- no HBM copy, no batch padding ever.
        xk = x.astype(cd)
        if self.d_in != d_in_p:
            xk = jnp.pad(xk, ((0, 0), (0, d_in_p - self.d_in)))

        budget = _vmem_budget_bytes()
        sublane = _sublane(cd)
        tile_b, tile_h = _choose_tiles(B, d_in_p, h_p, d_out_p,
                                       cd_size, out_size, budget, sublane)
        n_b = _cdiv(B, tile_b)
        n_h = h_p // tile_h

        flops = 2 * B * d_in_p * h_p + 2 * B * h_p * d_out_p
        bytes_accessed = (B * d_in_p * cd_size
                          + (d_in_p * h_p + h_p * d_out_p) * cd_size
                          + (h_p + d_out_p) * 4
                          + B * d_out_p * out_size)
        cost = pl.CostEstimate(flops=flops, transcendentals=0,
                               bytes_accessed=bytes_accessed)

        if n_h == 1:
            # Fast path: both weight matrices VMEM-resident for the whole grid;
            # constant index_map + single buffer => fetched exactly once.
            resident = pl.Buffered(1)
            grid_spec = pltpu.PrefetchScalarGridSpec(
                num_scalar_prefetch=0,
                grid=(n_b,),
                in_specs=[
                    pl.BlockSpec((tile_b, d_in_p), lambda i: (i, 0)),
                    pl.BlockSpec((d_in_p, h_p), lambda i: (0, 0), pipeline_mode=resident),
                    pl.BlockSpec((1, h_p), lambda i: (0, 0), pipeline_mode=resident),
                    pl.BlockSpec((h_p, d_out_p), lambda i: (0, 0), pipeline_mode=resident),
                    pl.BlockSpec((1, d_out_p), lambda i: (0, 0), pipeline_mode=resident),
                ],
                out_specs=pl.BlockSpec((tile_b, d_out_p), lambda i: (i, 0)),
            )
            kernel = _mlp_kernel_resident
            dims = ("parallel",)
        else:
            # Weights exceed the VMEM budget: tile the hidden dim on a second
            # (reduction) grid axis, accumulate fc2 in an f32 VMEM scratch.
            grid_spec = pltpu.PrefetchScalarGridSpec(
                num_scalar_prefetch=0,
                grid=(n_b, n_h),
                in_specs=[
                    pl.BlockSpec((tile_b, d_in_p), lambda i, k: (i, 0)),
                    pl.BlockSpec((d_in_p, tile_h), lambda i, k: (0, k)),
                    pl.BlockSpec((1, tile_h), lambda i, k: (0, k)),
                    pl.BlockSpec((tile_h, d_out_p), lambda i, k: (k, 0)),
                    pl.BlockSpec((1, d_out_p), lambda i, k: (0, 0)),
                ],
                out_specs=pl.BlockSpec((tile_b, d_out_p), lambda i, k: (i, 0)),
                scratch_shapes=[pltpu.VMEM((tile_b, d_out_p), jnp.float32)],
            )
            kernel = _mlp_kernel_htiled
            dims = ("parallel", "arbitrary")

        out_p = pl.pallas_call(
            kernel,
            out_shape=jax.ShapeDtypeStruct((B, d_out_p), out_dtype),
            grid_spec=grid_spec,
            compiler_params=pltpu.CompilerParams(
                dimension_semantics=dims,
                vmem_limit_bytes=budget,
            ),
            cost_estimate=cost,
        )(xk, w1p, b1p, w2p, b2p)

        # Rows were never padded; only slice off the D_out lane remainder.
        if self.d_out != d_out_p:
            out_p = out_p[:, :self.d_out]
        return out_p


def init_params(key, input_dim, hidden_dim, output_dim, dtype=jnp.float32):
    """Deterministic init mimicking nn.Linear's uniform(-1/sqrt(fan_in), +...)."""
    k1, k2, k3, k4 = jax.random.split(key, 4)
    bound1 = 1.0 / jnp.sqrt(input_dim)
    bound2 = 1.0 / jnp.sqrt(hidden_dim)
    # Stored already transposed relative to PyTorch: [in, out].
    w1 = jax.random.uniform(k1, (input_dim, hidden_dim), dtype, -bound1, bound1)
    b1 = jax.random.uniform(k2, (hidden_dim,), dtype, -bound1, bound1)
    w2 = jax.random.uniform(k3, (hidden_dim, output_dim), dtype, -bound2, bound2)
    b2 = jax.random.uniform(k4, (output_dim,), dtype, -bound2, bound2)
    return w1, b1, w2, b2


if __name__ == "__main__":
    # Small smoke-test shapes consistent with the module.
    input_dim, hidden_dim, output_dim = 32, 64, 16
    batch = 8

    key = jax.random.PRNGKey(0)
    kx, kp = jax.random.split(key)
    x = jax.random.normal(kx, (batch, input_dim), jnp.float32)
    w1, b1, w2, b2 = init_params(kp, input_dim, hidden_dim, output_dim)

    ref = jnp.maximum(x @ w1 + b1, 0.0) @ w2 + b2

    # f32 path: exact semantics of the PyTorch module.
    model = CustomNNPallas(w1, b1, w2, b2)
    out = jax.block_until_ready(model(x))
    assert out.shape == (batch, output_dim)
    assert out.dtype == x.dtype
    assert jnp.allclose(out, ref, atol=1e-5, rtol=1e-5)

    # bf16-operand path (recommended on v6e/v7x): f32 accumulation, looser tol.
    model_bf16 = CustomNNPallas(w1, b1, w2, b2, compute_dtype=jnp.bfloat16)
    out_bf16 = jax.block_until_ready(model_bf16(x))
    assert out_bf16.shape == (batch, output_dim)
    assert jnp.allclose(out_bf16, ref, atol=5e-2, rtol=5e-2)

    print("KERNEL_OK")
</pallas_src>

<mosaic_0001>
module attributes {stable_mosaic.version = 11 : i64} {
  func.func @_mlp_kernel_resident(%arg0: i32, %arg1: memref<8x128xf32, #tpu.memory_space<vmem>>, %arg2: memref<128x128xf32, #tpu.memory_space<vmem>>, %arg3: memref<1x128xf32, #tpu.memory_space<vmem>>, %arg4: memref<128x128xf32, #tpu.memory_space<vmem>>, %arg5: memref<1x128xf32, #tpu.memory_space<vmem>>, %arg6: memref<8x128xf32, #tpu.memory_space<vmem>>) attributes {dimension_semantics = [#tpu.dimension_semantics<parallel>], iteration_bounds = array<i64: 1>, scalar_prefetch = 0 : i64, scratch_operands = 0 : i64, tpu.core_type = #tpu.core_type<tc>, window_params = [{transform_indices = @transform_0, window_bounds = array<i64: 8, 128>}, {pipeline_mode = #tpu.pipeline_mode<synchronous>, transform_indices = @transform_1, window_bounds = array<i64: 128, 128>}, {pipeline_mode = #tpu.pipeline_mode<synchronous>, transform_indices = @transform_2, window_bounds = array<i64: 1, 128>}, {pipeline_mode = #tpu.pipeline_mode<synchronous>, transform_indices = @transform_3, window_bounds = array<i64: 128, 128>}, {pipeline_mode = #tpu.pipeline_mode<synchronous>, transform_indices = @transform_4, window_bounds = array<i64: 1, 128>}, {transform_indices = @transform_5, window_bounds = array<i64: 8, 128>}]} {
    %c0 = arith.constant 0 : index
    %c0_0 = arith.constant 0 : index
    %0 = vector.load %arg1[%c0, %c0_0] : memref<8x128xf32, #tpu.memory_space<vmem>>, vector<8x128xf32>
    %c0_1 = arith.constant 0 : index
    %c0_2 = arith.constant 0 : index
    %1 = vector.load %arg2[%c0_1, %c0_2] : memref<128x128xf32, #tpu.memory_space<vmem>>, vector<128x128xf32>
    %cst = arith.constant dense<0.000000e+00> : vector<8x128xf32>
    %2 = tpu.matmul %0, %1, %cst {dimension_numbers = #tpu.dot_dimension_numbers<[1], [0], [0], [1], [0, 0, 1, 1], [], []>} : vector<8x128xf32>, vector<128x128xf32>, vector<8x128xf32> -> vector<8x128xf32>
    %c0_3 = arith.constant 0 : index
    %c0_4 = arith.constant 0 : index
    %3 = vector.load %arg3[%c0_3, %c0_4] : memref<1x128xf32, #tpu.memory_space<vmem>>, vector<1x128xf32>
    %4 = vector.broadcast %3 : vector<1x128xf32> to vector<8x128xf32>
    %5 = arith.addf %2, %4 : vector<8x128xf32>
    %cst_5 = arith.constant 0.000000e+00 : f32
    %6 = vector.broadcast %cst_5 : f32 to vector<8x128xf32>
    %7 = arith.maximumf %5, %6 : vector<8x128xf32>
    %c0_6 = arith.constant 0 : index
    %c0_7 = arith.constant 0 : index
    %8 = vector.load %arg4[%c0_6, %c0_7] : memref<128x128xf32, #tpu.memory_space<vmem>>, vector<128x128xf32>
    %cst_8 = arith.constant dense<0.000000e+00> : vector<8x128xf32>
    %9 = tpu.matmul %7, %8, %cst_8 {dimension_numbers = #tpu.dot_dimension_numbers<[1], [0], [0], [1], [0, 0, 1, 1], [], []>} : vector<8x128xf32>, vector<128x128xf32>, vector<8x128xf32> -> vector<8x128xf32>
    %c0_9 = arith.constant 0 : index
    %c0_10 = arith.constant 0 : index
    %10 = vector.load %arg5[%c0_9, %c0_10] : memref<1x128xf32, #tpu.memory_space<vmem>>, vector<1x128xf32>
    %11 = vector.broadcast %10 : vector<1x128xf32> to vector<8x128xf32>
    %12 = arith.addf %9, %11 : vector<8x128xf32>
    %c0_11 = arith.constant 0 : index
    %c0_12 = arith.constant 0 : index
    %13 = vector.load %arg6[%c0_11, %c0_12] : memref<8x128xf32, #tpu.memory_space<vmem>>, vector<8x128xf32>
    tpu.vector_store %arg6[%c0_11, %c0_12], %12 {strides = array<i32>} : memref<8x128xf32, #tpu.memory_space<vmem>>, vector<8x128xf32>,
    return
  }
  func.func @transform_0(%arg0: i32) -> (i32, i32) {
    %c0_i32 = arith.constant 0 : i32
    %c0_i32_0 = arith.constant 0 : i32
    return %arg0, %c0_i32 : i32, i32
  }
  func.func @transform_1(%arg0: i32) -> (i32, i32) {
    %c0_i32 = arith.constant 0 : i32
    %c0_i32_0 = arith.constant 0 : i32
    %c0_i32_1 = arith.constant 0 : i32
    return %c0_i32, %c0_i32_0 : i32, i32
  }
  func.func @transform_2(%arg0: i32) -> (i32, i32) {
    %c0_i32 = arith.constant 0 : i32
    %c0_i32_0 = arith.constant 0 : i32
    %c0_i32_1 = arith.constant 0 : i32
    return %c0_i32, %c0_i32_0 : i32, i32
  }
  func.func @transform_3(%arg0: i32) -> (i32, i32) {
    %c0_i32 = arith.constant 0 : i32
    %c0_i32_0 = arith.constant 0 : i32
    %c0_i32_1 = arith.constant 0 : i32
    return %c0_i32, %c0_i32_0 : i32, i32
  }
  func.func @transform_4(%arg0: i32) -> (i32, i32) {
    %c0_i32 = arith.constant 0 : i32
    %c0_i32_0 = arith.constant 0 : i32
    %c0_i32_1 = arith.constant 0 : i32
    return %c0_i32, %c0_i32_0 : i32, i32
  }
  func.func @transform_5(%arg0: i32) -> (i32, i32) {
    %c0_i32 = arith.constant 0 : i32
    %c0_i32_0 = arith.constant 0 : i32
    return %arg0, %c0_i32 : i32, i32
  }
}

</mosaic_0001>

<llo_original>
// kernel: _forward.1
$region0: #{_forward.1}
  #allocation0 [shape = 'u32[]', space=smem, size = 0x4, offset = 0x4, fixed_abs, tag = 'smem constant byte address 0x4 - core index']
  #allocation1 [shape = 'u32[144,128]{1,0:T(1,128)}', space=vmem, size = 0x12000, scoped, tag = 'internal scratch']
  %s0 = inlined_call_operand.vmem [shape: f32[8,128], index: 0, kind: input, shape index: {}]
  %s1 = inlined_call_operand.hbm [shape: f32[128,128], index: 1, kind: input, shape index: {}]
  %s2 = inlined_call_operand.vmem [shape: f32[1,128], index: 2, kind: input, shape index: {}]
  %s3 = inlined_call_operand.hbm [shape: f32[128,128], index: 3, kind: input, shape index: {}]
  %s4 = inlined_call_operand.vmem [shape: f32[1,128], index: 4, kind: input, shape index: {}]
  %s5 = inlined_call_operand.hbm [shape: f32[8,128], index: 5, kind: output, shape index: {}]
  %s6 = sld [smem:[#allocation0]]
  $region38: #{_forward.1} parent=0
    _
  %s8 = ssub.s32 1, %s6
  %s9 = scalar_select 0, %s8, %s6
  $region1: #{_forward.1} parent=0
    #allocation2 [shape = 'u8[65536]{0}', space=vmem, size = 0x10000, scoped, tag = 'input window, operand 1, single buffered']
    #allocation3 [shape = 's32[1]{0}', space=sflag, size = 0x4, scoped, tag = 'scoped memory for _forward.1']
    #allocation4 [shape = 's32[1]{0}', space=sflag, size = 0x4, scoped, tag = 'scoped memory for _forward.1']
    #allocation5 [shape = 'u8[65536]{0}', space=vmem, size = 0x10000, scoped, tag = 'input window, operand 3, single buffered']
    #allocation6 [shape = 's32[1]{0}', space=sflag, size = 0x4, scoped, tag = 'scoped memory for _forward.1']
    #allocation7 [shape = 'u8[4096]{0}', space=vmem, size = 0x1000, scoped, tag = 'output window, operand 0, single buffered']
    %10 = vsyncpa [#allocation3], 0
    %11 = vsyncpa [#allocation6], 0
    %12 = vsyncpa [#allocation4], 0
    // Predicated region
    $region2: #{_forward.1} parent=1 // pred_check
      _
    $region3: #{_forward.1} parent=1 // pred_check_branch
      %14 = sbr.rel (0) target = $region5
    $region4: #{_forward.1} parent=1 // pred_region
      _
    $region5: #{_forward.1} parent=1 // pred_fallthru
      _
    // Predicated region
    $region6: #{_forward.1} parent=1 // pred_check
      _
    $region7: #{_forward.1} parent=1 // pred_check_branch
      %16 = sbr.rel (0) target = $region9
    $region8: #{_forward.1} parent=1 // pred_region
      %s18 = ssub.s32 2048, 2048
      %19 = vsyncadd [#allocation3], %s18
      %s20 = sshll.u32 [#allocation2], 4
      %s21 = int_to_ptr.vmem [resolvable:$true] %s20
      %26 = dma.hbm_to_vmem [thread:$0]  %s1, 2048, %s21, [#allocation3], 128, 128, 8
    $region9: #{_forward.1} parent=1 // pred_fallthru
      _
    // Predicated region
    $region10: #{_forward.1} parent=1 // pred_check
      _
    $region11: #{_forward.1} parent=1 // pred_check_branch
      %28 = sbr.rel (0) target = $region13
    $region12: #{_forward.1} parent=1 // pred_region
      _
    $region13: #{_forward.1} parent=1 // pred_fallthru
      _
    // Predicated region
    $region14: #{_forward.1} parent=1 // pred_check
      _
    $region15: #{_forward.1} parent=1 // pred_check_branch
      %30 = sbr.rel (0) target = $region17
    $region16: #{_forward.1} parent=1 // pred_region
      %s32 = ssub.s32 2048, 2048
      %33 = vsyncadd [#allocation6], %s32
      %s34 = sshll.u32 [#allocation5], 4
      %s35 = int_to_ptr.vmem [resolvable:$true] %s34
      %40 = dma.hbm_to_vmem [thread:$0]  %s3, 2048, %s35, [#allocation6], 128, 128, 8
    $region17: #{_forward.1} parent=1 // pred_fallthru
      _
    // Predicated region
    $region18: #{_forward.1} parent=1 // pred_check
      _
    $region19: #{_forward.1} parent=1 // pred_check_branch
      %42 = sbr.rel (0) target = $region21
    $region20: #{_forward.1} parent=1 // pred_region
      _
    $region21: #{_forward.1} parent=1 // pred_fallthru
      _
    // Predicated region
    $region22: #{_forward.1} parent=1 // pred_check
      _
    $region23: #{_forward.1} parent=1 // pred_check_branch
      %44 = sbr.rel (0) target = $region25
    $region24: #{_forward.1} parent=1 // pred_region
      %45 = dma.done [#allocation3], 2048
    $region25: #{_forward.1} parent=1 // pred_fallthru
      _
    // Predicated region
    $region26: #{_forward.1} parent=1 // pred_check
      _
    $region27: #{_forward.1} parent=1 // pred_check_branch
      %47 = sbr.rel (0) target = $region29
    $region28: #{_forward.1} parent=1 // pred_region
      %48 = dma.done [#allocation6], 2048
    $region29: #{_forward.1} parent=1 // pred_fallthru
      _
    %v49 = vld [vmem:[%s0] sm:$0xff]
    %v50 = vld [vmem:[#allocation2] sm:$0xff]
    %v51 = vld [vmem:[#allocation2 + $0x8] sm:$0xff]
    %v52 = vld [vmem:[#allocation2 + $0x10] sm:$0xff]
    %v53 = vld [vmem:[#allocation2 + $0x18] sm:$0xff]
    %v54 = vld [vmem:[#allocation2 + $0x20] sm:$0xff]
    %v55 = vld [vmem:[#allocation2 + $0x28] sm:$0xff]
    %v56 = vld [vmem:[#allocation2 + $0x30] sm:$0xff]
    %v57 = vld [vmem:[#allocation2 + $0x38] sm:$0xff]
    %v58 = vld [vmem:[#allocation2 + $0x40] sm:$0xff]
    %v59 = vld [vmem:[#allocation2 + $0x48] sm:$0xff]
    %v60 = vld [vmem:[#allocation2 + $0x50] sm:$0xff]
    %v61 = vld [vmem:[#allocation2 + $0x58] sm:$0xff]
    %v62 = vld [vmem:[#allocation2 + $0x60] sm:$0xff]
    %v63 = vld [vmem:[#allocation2 + $0x68] sm:$0xff]
    %v64 = vld [vmem:[#allocation2 + $0x70] sm:$0xff]
    %v65 = vld [vmem:[#allocation2 + $0x78] sm:$0xff]
    %v66 = vld [vmem:[%s2] sm:$0x1]
    %v68 = vlaneseq
    %v69 = vshrl.u32 %v68, 7
    %v70 = vsub.s32 0, %v69
    %v71 = vrot.slane %v66, %v70
    %73 = vmatprep.subr.mxu0 0.0
    %74 = vmatpush1.msra.mxu0 %v65
    %75 = vmatprep.subr.mxu0 0.0
    %76 = vmatpush1.msra.mxu0 %v64
    %77 = vmatprep.subr.mxu0 0.0
    %78 = vmatpush1.msra.mxu0 %v63
    %79 = vmatprep.subr.mxu0 0.0
    %80 = vmatpush1.msra.mxu0 %v62
    %81 = vmatprep.subr.mxu0 0.0
    %82 = vmatpush1.msra.mxu0 %v61
    %83 = vmatprep.subr.mxu0 0.0
    %84 = vmatpush1.msra.mxu0 %v60
    %85 = vmatprep.subr.mxu0 0.0
    %86 = vmatpush1.msra.mxu0 %v59
    %87 = vmatprep.subr.mxu0 0.0
    %88 = vmatpush1.msra.mxu0 %v58
    %89 = vmatprep.subr.mxu0 0.0
    %90 = vmatpush1.msra.mxu0 %v57
    %91 = vmatprep.subr.mxu0 0.0
    %92 = vmatpush1.msra.mxu0 %v56
    %93 = vmatprep.subr.mxu0 0.0
    %94 = vmatpush1.msra.mxu0 %v55
    %95 = vmatprep.subr.mxu0 0.0
    %96 = vmatpush1.msra.mxu0 %v54
    %97 = vmatprep.subr.mxu0 0.0
    %98 = vmatpush1.msra.mxu0 %v53
    %99 = vmatprep.subr.mxu0 0.0
    %100 = vmatpush1.msra.mxu0 %v52
    %101 = vmatprep.subr.mxu0 0.0
    %102 = vmatpush1.msra.mxu0 %v51
    %103 = vmatprep.subr.mxu0 0.0
    %104 = vmatpush1.msra.mxu0 %v50
    %105 = vmatprep.subr.mxu0 0.0
    %106 = vmatpush2.msra.mxu0 0.0
    %107 = vmatprep.subr.mxu0 0.0
    %108 = vmatpush2.msra.mxu0 0.0
    %109 = vmatprep.subr.mxu0 0.0
    %110 = vmatpush2.msra.mxu0 0.0
    %111 = vmatprep.subr.mxu0 0.0
    %112 = vmatpush2.msra.mxu0 0.0
    %113 = vmatprep.subr.mxu0 0.0
    %114 = vmatpush2.msra.mxu0 0.0
    %115 = vmatprep.subr.mxu0 0.0
    %116 = vmatpush2.msra.mxu0 0.0
    %117 = vmatprep.subr.mxu0 0.0
    %118 = vmatpush2.msra.mxu0 0.0
    %119 = vmatprep.subr.mxu0 0.0
    %120 = vmatpush2.msra.mxu0 0.0
    %121 = vmatprep.subr.mxu0 0.0
    %122 = vmatpush2.msra.mxu0 0.0
    %123 = vmatprep.subr.mxu0 0.0
    %124 = vmatpush2.msra.mxu0 0.0
    %125 = vmatprep.subr.mxu0 0.0
    %126 = vmatpush2.msra.mxu0 0.0
    %127 = vmatprep.subr.mxu0 0.0
    %128 = vmatpush2.msra.mxu0 0.0
    %129 = vmatprep.subr.mxu0 0.0
    %130 = vmatpush2.msra.mxu0 0.0
    %131 = vmatprep.subr.mxu0 0.0
    %132 = vmatpush2.msra.mxu0 0.0
    %133 = vmatprep.subr.mxu0 0.0
    %134 = vmatpush2.msra.mxu0 0.0
    %135 = vmatprep.subr.mxu0 0.0
    %136 = vmatpush2.msra.mxu0 0.0
    %137 = vmatprep.mubr.f32.mxu0 0.0
    %138 = vmatmul.mubr.f32.gmra.mxu0 %v49
    %v139 = vpop.f32.mrf.mxu0
    %v140 = vadd.f32 %v71, %v139
    %v141 = vpop.f32.mrf.mxu0
    %142 = vdwg.mxu0
    %v143 = vmax.f32 %v140, 0.0
    %v144 = vld [vmem:[#allocation5] sm:$0xff]
    %v145 = vld [vmem:[#allocation5 + $0x8] sm:$0xff]
    %v146 = vld [vmem:[#allocation5 + $0x10] sm:$0xff]
    %v147 = vld [vmem:[#allocation5 + $0x18] sm:$0xff]
    %v148 = vld [vmem:[#allocation5 + $0x20] sm:$0xff]
    %v149 = vld [vmem:[#allocation5 + $0x28] sm:$0xff]
    %v150 = vld [vmem:[#allocation5 + $0x30] sm:$0xff]
    %v151 = vld [vmem:[#allocation5 + $0x38] sm:$0xff]
    %v152 = vld [vmem:[#allocation5 + $0x40] sm:$0xff]
    %v153 = vld [vmem:[#allocation5 + $0x48] sm:$0xff]
    %v154 = vld [vmem:[#allocation5 + $0x50] sm:$0xff]
    %v155 = vld [vmem:[#allocation5 + $0x58] sm:$0xff]
    %v156 = vld [vmem:[#allocation5 + $0x60] sm:$0xff]
    %v157 = vld [vmem:[#allocation5 + $0x68] sm:$0xff]
    %v158 = vld [vmem:[#allocation5 + $0x70] sm:$0xff]
    %v159 = vld [vmem:[#allocation5 + $0x78] sm:$0xff]
    %v160 = vld [vmem:[%s4] sm:$0x1]
    %v162 = vlaneseq
    %v163 = vshrl.u32 %v162, 7
    %v164 = vsub.s32 0, %v163
    %v165 = vrot.slane %v160, %v164
    %167 = vmatprep.subr.mxu0 0.0
    %168 = vmatpush1.msra.mxu0 %v159
    %169 = vmatprep.subr.mxu0 0.0
    %170 = vmatpush1.msra.mxu0 %v158
    %171 = vmatprep.subr.mxu0 0.0
    %172 = vmatpush1.msra.mxu0 %v157
    %173 = vmatprep.subr.mxu0 0.0
    %174 = vmatpush1.msra.mxu0 %v156
    %175 = vmatprep.subr.mxu0 0.0
    %176 = vmatpush1.msra.mxu0 %v155
    %177 = vmatprep.subr.mxu0 0.0
    %178 = vmatpush1.msra.mxu0 %v154
    %179 = vmatprep.subr.mxu0 0.0
    %180 = vmatpush1.msra.mxu0 %v153
    %181 = vmatprep.subr.mxu0 0.0
    %182 = vmatpush1.msra.mxu0 %v152
    %183 = vmatprep.subr.mxu0 0.0
    %184 = vmatpush1.msra.mxu0 %v151
    %185 = vmatprep.subr.mxu0 0.0
    %186 = vmatpush1.msra.mxu0 %v150
    %187 = vmatprep.subr.mxu0 0.0
    %188 = vmatpush1.msra.mxu0 %v149
    %189 = vmatprep.subr.mxu0 0.0
    %190 = vmatpush1.msra.mxu0 %v148
    %191 = vmatprep.subr.mxu0 0.0
    %192 = vmatpush1.msra.mxu0 %v147
    %193 = vmatprep.subr.mxu0 0.0
    %194 = vmatpush1.msra.mxu0 %v146
    %195 = vmatprep.subr.mxu0 0.0
    %196 = vmatpush1.msra.mxu0 %v145
    %197 = vmatprep.subr.mxu0 0.0
    %198 = vmatpush1.msra.mxu0 %v144
    %199 = vmatprep.subr.mxu0 0.0
    %200 = vmatpush2.msra.mxu0 0.0
    %201 = vmatprep.subr.mxu0 0.0
    %202 = vmatpush2.msra.mxu0 0.0
    %203 = vmatprep.subr.mxu0 0.0
    %204 = vmatpush2.msra.mxu0 0.0
    %205 = vmatprep.subr.mxu0 0.0
    %206 = vmatpush2.msra.mxu0 0.0
    %207 = vmatprep.subr.mxu0 0.0
    %208 = vmatpush2.msra.mxu0 0.0
    %209 = vmatprep.subr.mxu0 0.0
    %210 = vmatpush2.msra.mxu0 0.0
    %211 = vmatprep.subr.mxu0 0.0
    %212 = vmatpush2.msra.mxu0 0.0
    %213 = vmatprep.subr.mxu0 0.0
    %214 = vmatpush2.msra.mxu0 0.0
    %215 = vmatprep.subr.mxu0 0.0
    %216 = vmatpush2.msra.mxu0 0.0
    %217 = vmatprep.subr.mxu0 0.0
    %218 = vmatpush2.msra.mxu0 0.0
    %219 = vmatprep.subr.mxu0 0.0
    %220 = vmatpush2.msra.mxu0 0.0
    %221 = vmatprep.subr.mxu0 0.0
    %222 = vmatpush2.msra.mxu0 0.0
    %223 = vmatprep.subr.mxu0 0.0
    %224 = vmatpush2.msra.mxu0 0.0
    %225 = vmatprep.subr.mxu0 0.0
    %226 = vmatpush2.msra.mxu0 0.0
    %227 = vmatprep.subr.mxu0 0.0
    %228 = vmatpush2.msra.mxu0 0.0
    %229 = vmatprep.subr.mxu0 0.0
    %230 = vmatpush2.msra.mxu0 0.0
    %231 = vmatprep.mubr.f32.mxu0 0.0
    %232 = vmatmul.mubr.f32.gmra.mxu0 %v143
    %v233 = vpop.f32.mrf.mxu0
    %v234 = vadd.f32 %v165, %v233
    %v235 = vpop.f32.mrf.mxu0
    %236 = vdwg.mxu0
    %237 = vst [vmem:[#allocation7] sm:$0xff] %v234
    // Predicated region
    $region30: #{_forward.1} parent=1 // pred_check
      _
    $region31: #{_forward.1} parent=1 // pred_check_branch
      %239 = sbr.rel (0) target = $region33
    $region32: #{_forward.1} parent=1 // pred_region
      %s241 = ssub.s32 128, 128
      %242 = vsyncadd [#allocation4], %s241
      %s244 = sshll.u32 [#allocation7], 4
      %s245 = int_to_ptr.vmem [resolvable:$true] %s244
      %247 = dma.vmem_to_hbm [thread:$0]  %s245, 128, %s5, [#allocation4]
    $region33: #{_forward.1} parent=1 // pred_fallthru
      _
    // Predicated region
    $region34: #{_forward.1} parent=1 // pred_check
      _
    $region35: #{_forward.1} parent=1 // pred_check_branch
      %249 = sbr.rel (0) target = $region37
    $region36: #{_forward.1} parent=1 // pred_region
      %250 = dma.done [#allocation4], 128
    $region37: #{_forward.1} parent=1 // pred_fallthru
      _
    %251 = vsyncpa [#allocation3], 1
    %252 = vsyncpa [#allocation6], 1
    %253 = vsyncpa [#allocation4], 1

</llo_original>
